<compile_context>
chip_gen: v7x
topology: tpu7x:2x2x1
jax: 0.10.0
libtpu: 0.0.40
codegen_flags: <defaults>
</compile_context>

<pallas_src>
import functools

import jax
import jax.numpy as jnp
from jax.experimental import pallas as pl
from jax.experimental.pallas import tpu as pltpu

_LANE = 128
_SUBLANE = 8
_MAX_WIDTH_GROUPS = 64                    # width cap = 64 * 128 = 8192 lanes
_VMEM_TARGET_BYTES = 12 * 1024 * 1024     # total resident tile footprint budget
_VMEM_LIMIT_BYTES = 32 * 1024 * 1024      # explicit scoped-VMEM limit (safe v5e..v7x)
_SPLIT_THRESHOLD_BYTES = 8 * 1024 * 1024  # force grid >= 2 above this (v7x megacore)


def _dropout_kernel_tpu(seed_ref, x_ref, o_ref, *, threshold: int, scale: float,
                        compute_dtype):
    """Fast path: hardware PRNG in-kernel, integer-threshold Bernoulli."""
    # Two independent seed words (base seed, tile index): no stream aliasing
    # between tile i of step s and tile i-1 of step s+1.
    pltpu.prng_seed(seed_ref[0], pl.program_id(0))
    bits = pltpu.bitcast(pltpu.prng_random_bits(x_ref.shape), jnp.uint32)
    keep = bits < jnp.uint32(threshold)
    scaled = x_ref[...].astype(compute_dtype) * jnp.asarray(scale, compute_dtype)
    o_ref[...] = jnp.where(keep, scaled, jnp.zeros_like(scaled)).astype(o_ref.dtype)


def _dropout_kernel_bits(x_ref, bits_ref, o_ref, *, threshold: int, scale: float,
                         compute_dtype):
    """Portable fallback (non-TPU backends): random bits supplied as input."""
    keep = bits_ref[...] < jnp.uint32(threshold)
    scaled = x_ref[...].astype(compute_dtype) * jnp.asarray(scale, compute_dtype)
    o_ref[...] = jnp.where(keep, scaled, jnp.zeros_like(scaled)).astype(o_ref.dtype)


def _choose_width(n: int):
    """Largest lane-dense width (multiple of 128, <= 8192) dividing n.

    Prefers widths that leave >= 8 rows so vregs are sublane-dense; returns
    None when n is not a multiple of 128 (ragged path).
    """
    if n % _LANE != 0:
        return None
    m = n // _LANE
    cap = max(1, min(_MAX_WIDTH_GROUPS, m // _SUBLANE))
    for d in range(cap, 0, -1):
        if m % d == 0:
            return d * _LANE
    return _LANE


def _compute_dtype_for(x_dtype):
    """bf16-native compute on chips with bf16 VALUs (v6e/v7x), else f32."""
    if jnp.dtype(x_dtype) == jnp.dtype(jnp.bfloat16):
        try:
            kind = jax.devices()[0].device_kind.lower()
        except Exception:  # no devices visible at trace time
            kind = ""
        if ("v6" in kind) or ("v7" in kind):
            # NOTE: 1/keep_prob rounded to bf16 adds ~2^-8 relative bias to the
            # kept values; acceptable for dropout, documented per review.
            return jnp.bfloat16
    return jnp.float32


def _block_rows_for(rows: int, width: int, itemsize: int, compute_itemsize: int):
    """Budget block size by element count, counting all tile-sized buffers:
    in + out (double-buffered) + u32 bits + compute temp + bool mask."""
    per_elem = 4 * itemsize + 4 + compute_itemsize + 1
    max_elems = max(_SUBLANE * width, _VMEM_TARGET_BYTES // per_elem)
    block_rows = max(_SUBLANE, (max_elems // width) // _SUBLANE * _SUBLANE)
    block_rows = min(block_rows, rows)
    # v7x: keep both TensorCores busy on mid/large arrays -> grid >= 2 steps.
    total_bytes = rows * width * itemsize
    if total_bytes > _SPLIT_THRESHOLD_BYTES and block_rows >= rows:
        half = (rows // 2) // _SUBLANE * _SUBLANE
        block_rows = max(_SUBLANE, half)
    return block_rows


def _call_tpu(x2d, seed, threshold, scale, compute_dtype, block_rows, width, grid):
    n = x2d.size
    itemsize = jnp.dtype(x2d.dtype).itemsize
    seed_arr = jnp.array([seed], dtype=jnp.int32)
    kernel = functools.partial(_dropout_kernel_tpu, threshold=threshold,
                               scale=scale, compute_dtype=compute_dtype)
    return pl.pallas_call(
        kernel,
        out_shape=jax.ShapeDtypeStruct(x2d.shape, x2d.dtype),
        grid_spec=pltpu.PrefetchScalarGridSpec(
            num_scalar_prefetch=1,
            grid=grid,
            in_specs=[pl.BlockSpec((block_rows, width), lambda i, seed_ref: (i, 0))],
            out_specs=pl.BlockSpec((block_rows, width), lambda i, seed_ref: (i, 0)),
        ),
        compiler_params=pltpu.CompilerParams(
            dimension_semantics=("parallel",),
            vmem_limit_bytes=_VMEM_LIMIT_BYTES,
        ),
        cost_estimate=pl.CostEstimate(
            flops=n, transcendentals=0, bytes_accessed=2 * n * itemsize),
    )(seed_arr, x2d)


def _call_portable(x2d, seed, threshold, scale, compute_dtype, block_rows, width, grid):
    # NOTE: produces a different (but statistically equivalent) mask than the
    # TPU HW-PRNG path for the same seed.
    bits = jax.random.bits(jax.random.PRNGKey(seed), shape=x2d.shape, dtype=jnp.uint32)
    kernel = functools.partial(_dropout_kernel_bits, threshold=threshold,
                               scale=scale, compute_dtype=compute_dtype)
    return pl.pallas_call(
        kernel,
        out_shape=jax.ShapeDtypeStruct(x2d.shape, x2d.dtype),
        grid=grid,
        in_specs=[
            pl.BlockSpec((block_rows, width), lambda i: (i, 0)),
            pl.BlockSpec((block_rows, width), lambda i: (i, 0)),
        ],
        out_specs=pl.BlockSpec((block_rows, width), lambda i: (i, 0)),
        compiler_params=pltpu.CompilerParams(dimension_semantics=("parallel",)),
    )(x2d, bits)


def custom_dropout(x, dropout_rate: float = 0.5, *, seed: int = 0, training: bool = True):
    """JAX/Pallas equivalent of Customdropoutlayer.forward.

    NOTE: callers must vary `seed` per training step to get a fresh mask.
    """
    if not training or dropout_rate == 0.0:
        return x  # eval mode: identity

    keep_prob = 1.0 - float(dropout_rate)
    # P(u32 bits < threshold) == keep_prob (clamp bias ~2^-32 for keep_prob ~ 1)
    threshold = min(int(round(keep_prob * 2.0 ** 32)), 2 ** 32 - 1)
    scale = 1.0 / keep_prob
    compute_dtype = _compute_dtype_for(x.dtype)

    orig_shape = x.shape
    n = x.size
    flat = x.reshape(-1)

    width = _choose_width(n)
    pad = 0
    if width is None:
        # Ragged tail (rare): pad to a whole number of (8, 128) vregs.
        # TODO(synk): handle the ragged tail with an in-kernel masked store
        # instead of a pad + slice (extra HBM passes) for odd element counts.
        width = _LANE
        pad = (-n) % (_SUBLANE * _LANE)
        flat = jnp.pad(flat, (0, pad))

    rows = flat.shape[0] // width
    x2d = flat.reshape(rows, width)

    itemsize = jnp.dtype(x.dtype).itemsize
    compute_itemsize = jnp.dtype(compute_dtype).itemsize
    block_rows = _block_rows_for(rows, width, itemsize, compute_itemsize)
    grid = (pl.cdiv(rows, block_rows),)

    # Kernel choice decided once at trace time (no runtime try/except, no sync).
    if jax.default_backend() == "tpu":
        out2d = _call_tpu(x2d, seed, threshold, scale, compute_dtype,
                          block_rows, width, grid)
    else:
        out2d = _call_portable(x2d, seed, threshold, scale, compute_dtype,
                               block_rows, width, grid)

    out_flat = out2d.reshape(-1)
    if pad:
        out_flat = out_flat[:n]
    return out_flat.reshape(orig_shape)


if __name__ == "__main__":
    key = jax.random.PRNGKey(0)
    # NCHW input, like a PyTorch conv activation.
    x = jax.random.normal(key, (2, 4, 16, 16), dtype=jnp.float32)

    dropout_rate = 0.5
    y = custom_dropout(x, dropout_rate=dropout_rate, seed=1234, training=True)
    y = jax.block_until_ready(y)

    # Sanity checks: shape/dtype preserved; surviving elements scaled by 1/keep.
    assert y.shape == x.shape and y.dtype == x.dtype
    keep = 1.0 - dropout_rate
    nz = y != 0
    assert bool(
        jnp.allclose(jnp.where(nz, y, 0.0), jnp.where(nz, x / keep, 0.0), atol=1e-5)
    )
    # Some elements kept, some dropped (statistically certain for 2048 elems).
    kept_frac = jnp.mean(nz.astype(jnp.float32))
    assert 0.0 < float(kept_frac) < 1.0

    # Eval mode is the identity.
    y_eval = jax.block_until_ready(
        custom_dropout(x, dropout_rate=dropout_rate, training=False)
    )
    assert bool(jnp.array_equal(y_eval, x))

    print("KERNEL_OK")
</pallas_src>

<mosaic_0001>
module attributes {stable_mosaic.version = 11 : i64} {
  func.func @_dropout_kernel_bits(%arg0: i32, %arg1: memref<8x256xf32, #tpu.memory_space<vmem>>, %arg2: memref<8x256xi32, #tpu.memory_space<vmem>>, %arg3: memref<8x256xf32, #tpu.memory_space<vmem>>) attributes {dimension_semantics = [#tpu.dimension_semantics<parallel>], iteration_bounds = array<i64: 1>, scalar_prefetch = 0 : i64, scratch_operands = 0 : i64, tpu.core_type = #tpu.core_type<tc>, window_params = [{transform_indices = @transform_0, window_bounds = array<i64: 8, 256>}, {transform_indices = @transform_1, window_bounds = array<i64: 8, 256>}, {transform_indices = @transform_2, window_bounds = array<i64: 8, 256>}]} {
    %c0 = arith.constant 0 : index
    %c0_0 = arith.constant 0 : index
    %0 = vector.load %arg2[%c0, %c0_0] : memref<8x256xi32, #tpu.memory_space<vmem>>, vector<8x256xi32>
    %c-2147483648_i32 = arith.constant -2147483648 : i32
    %1 = vector.broadcast %c-2147483648_i32 : i32 to vector<8x256xi32>
    %2 = arith.cmpi ult, %0, %1 : vector<8x256xi32>
    %c0_1 = arith.constant 0 : index
    %c0_2 = arith.constant 0 : index
    %3 = vector.load %arg1[%c0_1, %c0_2] : memref<8x256xf32, #tpu.memory_space<vmem>>, vector<8x256xf32>
    %cst = arith.constant 2.000000e+00 : f32
    %4 = vector.broadcast %cst : f32 to vector<8x256xf32>
    %5 = arith.mulf %3, %4 : vector<8x256xf32>
    %cst_3 = arith.constant 0.000000e+00 : f32
    %6 = vector.broadcast %cst_3 : f32 to vector<8x256xf32>
    %7 = arith.select %2, %5, %6 : vector<8x256xi1>, vector<8x256xf32>
    %c0_4 = arith.constant 0 : index
    %c0_5 = arith.constant 0 : index
    %8 = vector.load %arg3[%c0_4, %c0_5] : memref<8x256xf32, #tpu.memory_space<vmem>>, vector<8x256xf32>
    tpu.vector_store %arg3[%c0_4, %c0_5], %7 {strides = array<i32>} : memref<8x256xf32, #tpu.memory_space<vmem>>, vector<8x256xf32>,
    return
  }
  func.func @transform_0(%arg0: i32) -> (i32, i32) {
    %c0_i32 = arith.constant 0 : i32
    %c0_i32_0 = arith.constant 0 : i32
    return %arg0, %c0_i32 : i32, i32
  }
  func.func @transform_1(%arg0: i32) -> (i32, i32) {
    %c0_i32 = arith.constant 0 : i32
    %c0_i32_0 = arith.constant 0 : i32
    return %arg0, %c0_i32 : i32, i32
  }
  func.func @transform_2(%arg0: i32) -> (i32, i32) {
    %c0_i32 = arith.constant 0 : i32
    %c0_i32_0 = arith.constant 0 : i32
    return %arg0, %c0_i32 : i32, i32
  }
}

</mosaic_0001>

<llo_original>
// kernel: tpu_custom_call.1
$region0: #{tpu_custom_call.1}
  #allocation0 [shape = 'u32[]', space=smem, size = 0x4, offset = 0x4, fixed_abs, tag = 'smem constant byte address 0x4 - core index']
  #allocation1 [shape = 'u32[144,128]{1,0:T(1,128)}', space=vmem, size = 0x12000, scoped, tag = 'internal scratch']
  %s0 = inlined_call_operand.hbm [shape: f32[8,256], index: 0, kind: input, shape index: {}]
  %s1 = inlined_call_operand.hbm [shape: u32[8,256], index: 1, kind: input, shape index: {}]
  %s2 = inlined_call_operand.hbm [shape: f32[8,256], index: 2, kind: output, shape index: {}]
  %s3 = sld [smem:[#allocation0]]
  $region26: #{tpu_custom_call.1} parent=0
    _
  %s5 = ssub.s32 1, %s3
  %s6 = scalar_select 0, %s5, %s3
  $region1: #{tpu_custom_call.1} parent=0
    #allocation2 [shape = 'u8[8192]{0}', space=vmem, size = 0x2000, scoped, tag = 'input window, operand 0, single buffered']
    #allocation3 [shape = 's32[1]{0}', space=sflag, size = 0x4, scoped, tag = 'scoped memory for tpu_custom_call.1']
    #allocation4 [shape = 's32[1]{0}', space=sflag, size = 0x4, scoped, tag = 'scoped memory for tpu_custom_call.1']
    #allocation5 [shape = 'u8[8192]{0}', space=vmem, size = 0x2000, scoped, tag = 'input window, operand 1, single buffered']
    #allocation6 [shape = 's32[1]{0}', space=sflag, size = 0x4, scoped, tag = 'scoped memory for tpu_custom_call.1']
    #allocation7 [shape = 'u8[8192]{0}', space=vmem, size = 0x2000, scoped, tag = 'output window, operand 0, single buffered']
    %7 = vsyncpa [#allocation3], 0
    %8 = vsyncpa [#allocation6], 0
    %9 = vsyncpa [#allocation4], 0
    // Predicated region
    $region2: #{tpu_custom_call.1} parent=1 // pred_check
      _
    $region3: #{tpu_custom_call.1} parent=1 // pred_check_branch
      %11 = sbr.rel (0) target = $region5
    $region4: #{tpu_custom_call.1} parent=1 // pred_region
      %s13 = ssub.s32 256, 256
      %14 = vsyncadd [#allocation3], %s13
      %s16 = sshll.u32 [#allocation2], 4
      %s17 = int_to_ptr.vmem [resolvable:$true] %s16
      %19 = dma.hbm_to_vmem [thread:$0]  %s0, 256, %s17, [#allocation3]
    $region5: #{tpu_custom_call.1} parent=1 // pred_fallthru
      _
    // Predicated region
    $region6: #{tpu_custom_call.1} parent=1 // pred_check
      _
    $region7: #{tpu_custom_call.1} parent=1 // pred_check_branch
      %21 = sbr.rel (0) target = $region9
    $region8: #{tpu_custom_call.1} parent=1 // pred_region
      %s23 = ssub.s32 256, 256
      %24 = vsyncadd [#allocation6], %s23
      %s26 = sshll.u32 [#allocation5], 4
      %s27 = int_to_ptr.vmem [resolvable:$true] %s26
      %29 = dma.hbm_to_vmem [thread:$0]  %s1, 256, %s27, [#allocation6]
    $region9: #{tpu_custom_call.1} parent=1 // pred_fallthru
      _
    // Predicated region
    $region10: #{tpu_custom_call.1} parent=1 // pred_check
      _
    $region11: #{tpu_custom_call.1} parent=1 // pred_check_branch
      %31 = sbr.rel (0) target = $region13
    $region12: #{tpu_custom_call.1} parent=1 // pred_region
      %32 = dma.done [#allocation3], 256
    $region13: #{tpu_custom_call.1} parent=1 // pred_fallthru
      _
    // Predicated region
    $region14: #{tpu_custom_call.1} parent=1 // pred_check
      _
    $region15: #{tpu_custom_call.1} parent=1 // pred_check_branch
      %34 = sbr.rel (0) target = $region17
    $region16: #{tpu_custom_call.1} parent=1 // pred_region
      %35 = dma.done [#allocation6], 256
    $region17: #{tpu_custom_call.1} parent=1 // pred_fallthru
      _
    %v36 = vld [vmem:[#allocation5] sm:$0xff]
    %v37 = vld [vmem:[#allocation5 + $0x8] sm:$0xff]
    %vm38 = vcmp.lt.u32.totalorder %v36, 2147483648
    %vm39 = vcmp.lt.u32.totalorder %v37, 2147483648
    %v40 = vld [vmem:[#allocation2] sm:$0xff]
    %v41 = vld [vmem:[#allocation2 + $0x8] sm:$0xff]
    %v42 = vmul.f32 %v40, 2.0
    %v43 = vmul.f32 %v41, 2.0
    %v44 = vsel %vm38, %v42, 0.0
    %v45 = vsel %vm39, %v43, 0.0
    %46 = vst [vmem:[#allocation7] sm:$0xff] %v44
    %47 = vst [vmem:[#allocation7 + $0x8] sm:$0xff] %v45
    // Predicated region
    $region18: #{tpu_custom_call.1} parent=1 // pred_check
      _
    $region19: #{tpu_custom_call.1} parent=1 // pred_check_branch
      %49 = sbr.rel (0) target = $region21
    $region20: #{tpu_custom_call.1} parent=1 // pred_region
      %s51 = ssub.s32 256, 256
      %52 = vsyncadd [#allocation4], %s51
      %s54 = sshll.u32 [#allocation7], 4
      %s55 = int_to_ptr.vmem [resolvable:$true] %s54
      %57 = dma.vmem_to_hbm [thread:$0]  %s55, 256, %s2, [#allocation4]
    $region21: #{tpu_custom_call.1} parent=1 // pred_fallthru
      _
    // Predicated region
    $region22: #{tpu_custom_call.1} parent=1 // pred_check
      _
    $region23: #{tpu_custom_call.1} parent=1 // pred_check_branch
      %59 = sbr.rel (0) target = $region25
    $region24: #{tpu_custom_call.1} parent=1 // pred_region
      %60 = dma.done [#allocation4], 256
    $region25: #{tpu_custom_call.1} parent=1 // pred_fallthru
      _
    %61 = vsyncpa [#allocation3], 1
    %62 = vsyncpa [#allocation6], 1
    %63 = vsyncpa [#allocation4], 1

</llo_original>
